<compile_context>
chip_gen: v5e
topology: v5e:2x2
jax: 0.10.0
libtpu: 0.0.40
codegen_flags: <defaults>
</compile_context>

<pallas_src>
import jax
import jax.numpy as jnp
from jax.experimental import pallas as pl
from jax.experimental.pallas import tpu as pltpu

_LANES = 128


def _l1_loss_kernel(pred_ref, gt_ref, out_ref, acc_ref):
    # grid = (B, num_row_tiles); axis 0 "parallel", axis 1 "arbitrary".
    t = pl.program_id(1)
    nt = pl.num_programs(1)

    @pl.when(t == 0)
    def _():
        acc_ref[0] = jnp.float32(0.0)   # running loss sum for this sample
        acc_ref[1] = jnp.float32(0.0)   # running valid-pixel count

    pred = pred_ref[...].astype(jnp.float32)
    gt = gt_ref[...].astype(jnp.float32)

    diff = pred - gt
    adiff = jnp.abs(diff)
    # smooth_l1 with beta = 1.0 (PyTorch default)
    sl1 = jnp.where(adiff < 1.0, 0.5 * diff * diff, adiff - 0.5)

    mask = (gt > 0.0).astype(jnp.float32)
    masked = sl1 * mask

    acc_ref[0] += jnp.sum(masked)
    acc_ref[1] += jnp.sum(mask)

    @pl.when(t == nt - 1)
    def _():
        ratio = acc_ref[0] / (acc_ref[1] + 1.0)
        out_ref[...] = jnp.full(out_ref.shape, ratio, dtype=jnp.float32)


def l1_loss(disparity_pred, disparity_gt, *, rows_per_tile=1024):
    """Masked smooth-L1 disparity loss, returns a scalar (f32).

    Matches:  mean_b( sum_hw(smooth_l1 * (gt>0)) / (sum_hw(gt>0) + 1) )
    """
    assert disparity_pred.shape == disparity_gt.shape
    B = int(disparity_pred.shape[0])
    N = 1
    for d in disparity_pred.shape[1:]:
        N *= int(d)

    # Lane-dense layout: flatten spatial dims to (rows, 128).
    rows = -(-N // _LANES)                 # ceil(N / 128)
    if rows <= rows_per_tile:
        th = rows                          # single tile = full extent (always legal)
        rows_pad = rows
    else:
        th = rows_per_tile                 # multiple of 8
        rows_pad = -(-rows // th) * th
    n_pad = rows_pad * _LANES
    num_tiles = rows_pad // th

    pred_f = disparity_pred.reshape(B, N)
    gt_f = disparity_gt.reshape(B, N)
    if n_pad != N:
        # Pad with zeros: gt=0 -> mask=0, so padded pixels contribute nothing.
        pad = n_pad - N
        pred_f = jnp.pad(pred_f, ((0, 0), (0, pad)))
        gt_f = jnp.pad(gt_f, ((0, 0), (0, pad)))
    pred2 = pred_f.reshape(B, rows_pad, _LANES)
    gt2 = gt_f.reshape(B, rows_pad, _LANES)

    itemsize = jnp.dtype(disparity_pred.dtype).itemsize
    cost = pl.CostEstimate(
        flops=10 * B * n_pad,
        transcendentals=0,
        bytes_accessed=2 * B * n_pad * itemsize + B * 4,
    )

    out = pl.pallas_call(
        _l1_loss_kernel,
        out_shape=jax.ShapeDtypeStruct((B, 1, _LANES), jnp.float32),
        grid=(B, num_tiles),
        in_specs=[
            pl.BlockSpec((1, th, _LANES), lambda b, t: (b, t, 0)),
            pl.BlockSpec((1, th, _LANES), lambda b, t: (b, t, 0)),
        ],
        # Per-sample output block, resident across the row-tile axis;
        # written once on the last tile. Lane-dense (128 wide) store.
        out_specs=pl.BlockSpec((1, 1, _LANES), lambda b, t: (b, 0, 0)),
        scratch_shapes=[pltpu.SMEM((2,), jnp.float32)],
        compiler_params=pltpu.CompilerParams(
            dimension_semantics=("parallel", "arbitrary")),
        cost_estimate=cost,
    )(pred2, gt2)

    per_sample = out[:, 0, 0]
    return jnp.mean(per_sample)


def l1_loss_reference(pred, gt):
    """Pure-JAX reference (mirrors the PyTorch module)."""
    mask = (gt > 0.0).astype(jnp.float32)
    diff = pred.astype(jnp.float32) - gt.astype(jnp.float32)
    adiff = jnp.abs(diff)
    sl1 = jnp.where(adiff < 1.0, 0.5 * diff * diff, adiff - 0.5)
    sl1 = sl1 * mask
    per_sample = jnp.sum(sl1, axis=(-1, -2)) / (jnp.sum(mask, axis=(-1, -2)) + 1.0)
    return jnp.mean(per_sample)


if __name__ == "__main__":
    key = jax.random.PRNGKey(0)
    k1, k2 = jax.random.split(key)

    B, H, W = 2, 16, 16
    disparity_pred = jax.random.normal(k1, (B, H, W), dtype=jnp.float32) * 2.0
    # gt: mix of positive (valid) and non-positive (invalid, masked-out) pixels
    disparity_gt = jax.random.normal(k2, (B, H, W), dtype=jnp.float32) * 2.0

    loss = l1_loss(disparity_pred, disparity_gt)
    jax.block_until_ready(loss)

    ref = l1_loss_reference(disparity_pred, disparity_gt)
    assert jnp.allclose(loss, ref, rtol=1e-5, atol=1e-6), (loss, ref)

    print("KERNEL_OK")
</pallas_src>

<mosaic_0001>
module attributes {stable_mosaic.version = 11 : i64} {
  func.func @_l1_loss_kernel(%arg0: i32, %arg1: i32, %arg2: memref<1x2x128xf32, #tpu.memory_space<vmem>>, %arg3: memref<1x2x128xf32, #tpu.memory_space<vmem>>, %arg4: memref<1x1x128xf32, #tpu.memory_space<vmem>>, %arg5: memref<2xf32, #tpu.memory_space<smem>>) attributes {dimension_semantics = [#tpu.dimension_semantics<parallel>, #tpu.dimension_semantics<arbitrary>], iteration_bounds = array<i64: 2, 1>, scalar_prefetch = 0 : i64, scratch_operands = 1 : i64, tpu.core_type = #tpu.core_type<tc>, window_params = [{transform_indices = @transform_0, window_bounds = array<i64: 1, 2, 128>}, {transform_indices = @transform_1, window_bounds = array<i64: 1, 2, 128>}, {transform_indices = @transform_2, window_bounds = array<i64: 1, 1, 128>}]} {
    %c0_i32 = arith.constant 0 : i32
    %0 = arith.cmpi eq, %arg1, %c0_i32 : i32
    %1 = arith.extui %0 : i1 to i32
    %c0_i32_0 = arith.constant 0 : i32
    %2 = arith.cmpi ne, %1, %c0_i32_0 : i32
    scf.if %2 {
      %cst_16 = arith.constant 0.000000e+00 : f32
      %c0_17 = arith.constant 0 : index
      %37 = memref.load %arg5[%c0_17] : memref<2xf32, #tpu.memory_space<smem>>
      memref.store %cst_16, %arg5[%c0_17] : memref<2xf32, #tpu.memory_space<smem>>
      %cst_18 = arith.constant 0.000000e+00 : f32
      %c1_19 = arith.constant 1 : index
      %38 = memref.load %arg5[%c1_19] : memref<2xf32, #tpu.memory_space<smem>>
      memref.store %cst_18, %arg5[%c1_19] : memref<2xf32, #tpu.memory_space<smem>>
    } else {
    }
    %c0 = arith.constant 0 : index
    %c0_1 = arith.constant 0 : index
    %c0_2 = arith.constant 0 : index
    %3 = vector.load %arg2[%c0, %c0_1, %c0_2] : memref<1x2x128xf32, #tpu.memory_space<vmem>>, vector<1x2x128xf32>
    %c0_3 = arith.constant 0 : index
    %c0_4 = arith.constant 0 : index
    %c0_5 = arith.constant 0 : index
    %4 = vector.load %arg3[%c0_3, %c0_4, %c0_5] : memref<1x2x128xf32, #tpu.memory_space<vmem>>, vector<1x2x128xf32>
    %5 = arith.subf %3, %4 : vector<1x2x128xf32>
    %6 = math.absf %5 : vector<1x2x128xf32>
    %cst = arith.constant 1.000000e+00 : f32
    %7 = vector.broadcast %cst : f32 to vector<1x2x128xf32>
    %8 = arith.cmpf olt, %6, %7 : vector<1x2x128xf32>
    %cst_6 = arith.constant 5.000000e-01 : f32
    %9 = vector.broadcast %cst_6 : f32 to vector<1x2x128xf32>
    %10 = arith.mulf %9, %5 : vector<1x2x128xf32>
    %11 = arith.mulf %10, %5 : vector<1x2x128xf32>
    %cst_7 = arith.constant 5.000000e-01 : f32
    %12 = vector.broadcast %cst_7 : f32 to vector<1x2x128xf32>
    %13 = arith.subf %6, %12 : vector<1x2x128xf32>
    %14 = arith.select %8, %11, %13 : vector<1x2x128xi1>, vector<1x2x128xf32>
    %cst_8 = arith.constant 0.000000e+00 : f32
    %15 = vector.broadcast %cst_8 : f32 to vector<1x2x128xf32>
    %16 = arith.cmpf ogt, %4, %15 : vector<1x2x128xf32>
    %17 = arith.extui %16 : vector<1x2x128xi1> to vector<1x2x128xi32>
    %18 = arith.sitofp %17 : vector<1x2x128xi32> to vector<1x2x128xf32>
    %19 = arith.mulf %14, %18 : vector<1x2x128xf32>
    %c0_9 = arith.constant 0 : index
    %20 = memref.load %arg5[%c0_9] : memref<2xf32, #tpu.memory_space<smem>>
    %21 = vector.shape_cast %19 : vector<1x2x128xf32> to vector<1x1x2x128xf32>
    %cst_10 = arith.constant dense<0.000000e+00> : vector<1xf32>
    %22 = vector.multi_reduction <add>, %21, %cst_10 [1, 2, 3] : vector<1x1x2x128xf32> to vector<1xf32>
    %23 = vector.shape_cast %22 : vector<1xf32> to vector<1x1x1x1xf32>
    %24 = vector.extract %23[0, 0, 0, 0] : f32 from vector<1x1x1x1xf32>
    %25 = arith.addf %20, %24 : f32
    %c0_11 = arith.constant 0 : index
    %26 = memref.load %arg5[%c0_11] : memref<2xf32, #tpu.memory_space<smem>>
    memref.store %25, %arg5[%c0_11] : memref<2xf32, #tpu.memory_space<smem>>
    %c1 = arith.constant 1 : index
    %27 = memref.load %arg5[%c1] : memref<2xf32, #tpu.memory_space<smem>>
    %28 = vector.shape_cast %18 : vector<1x2x128xf32> to vector<1x1x2x128xf32>
    %cst_12 = arith.constant dense<0.000000e+00> : vector<1xf32>
    %29 = vector.multi_reduction <add>, %28, %cst_12 [1, 2, 3] : vector<1x1x2x128xf32> to vector<1xf32>
    %30 = vector.shape_cast %29 : vector<1xf32> to vector<1x1x1x1xf32>
    %31 = vector.extract %30[0, 0, 0, 0] : f32 from vector<1x1x1x1xf32>
    %32 = arith.addf %27, %31 : f32
    %c1_13 = arith.constant 1 : index
    %33 = memref.load %arg5[%c1_13] : memref<2xf32, #tpu.memory_space<smem>>
    memref.store %32, %arg5[%c1_13] : memref<2xf32, #tpu.memory_space<smem>>
    %c0_i32_14 = arith.constant 0 : i32
    %34 = arith.cmpi eq, %arg1, %c0_i32_14 : i32
    %35 = arith.extui %34 : i1 to i32
    %c0_i32_15 = arith.constant 0 : i32
    %36 = arith.cmpi ne, %35, %c0_i32_15 : i32
    scf.if %36 {
      %c0_16 = arith.constant 0 : index
      %37 = memref.load %arg5[%c0_16] : memref<2xf32, #tpu.memory_space<smem>>
      %c1_17 = arith.constant 1 : index
      %38 = memref.load %arg5[%c1_17] : memref<2xf32, #tpu.memory_space<smem>>
      %cst_18 = arith.constant 1.000000e+00 : f32
      %39 = arith.addf %38, %cst_18 : f32
      %40 = arith.divf %37, %39 : f32
      %41 = vector.broadcast %40 : f32 to vector<1x1x128xf32>
      %c0_19 = arith.constant 0 : index
      %c0_20 = arith.constant 0 : index
      %c0_21 = arith.constant 0 : index
      %42 = vector.load %arg4[%c0_19, %c0_20, %c0_21] : memref<1x1x128xf32, #tpu.memory_space<vmem>>, vector<1x1x128xf32>
      tpu.vector_store %arg4[%c0_19, %c0_20, %c0_21], %41 {strides = array<i32>} : memref<1x1x128xf32, #tpu.memory_space<vmem>>, vector<1x1x128xf32>,
    } else {
    }
    return
  }
  func.func @transform_0(%arg0: i32, %arg1: i32) -> (i32, i32, i32) {
    %c0_i32 = arith.constant 0 : i32
    %c0_i32_0 = arith.constant 0 : i32
    return %arg0, %arg1, %c0_i32 : i32, i32, i32
  }
  func.func @transform_1(%arg0: i32, %arg1: i32) -> (i32, i32, i32) {
    %c0_i32 = arith.constant 0 : i32
    %c0_i32_0 = arith.constant 0 : i32
    return %arg0, %arg1, %c0_i32 : i32, i32, i32
  }
  func.func @transform_2(%arg0: i32, %arg1: i32) -> (i32, i32, i32) {
    %c0_i32 = arith.constant 0 : i32
    %c0_i32_0 = arith.constant 0 : i32
    %c0_i32_1 = arith.constant 0 : i32
    return %arg0, %c0_i32, %c0_i32_0 : i32, i32, i32
  }
}

</mosaic_0001>

<llo_original>
// kernel: tpu_custom_call.1
$region0: #{tpu_custom_call.1}
  #allocation0 [shape = 'u32[]', space=smem, size = 0x4, offset = 0x4, fixed_abs, tag = 'smem constant byte address 0x4 - core index']
  #allocation1 [shape = 'u32[72,128]{1,0:T(1,128)}', space=vmem, size = 0x9000, scoped, tag = 'internal scratch']
  #allocation2 [shape = 'f32[2]{0:T(128)}', space=smem, size = 0x200, scoped, tag = 'scratch operand']
  %s0 = inlined_call_operand.hbm [shape: f32[2,2,128], index: 0, kind: input, shape index: {}]
  %s1 = inlined_call_operand.hbm [shape: f32[2,2,128], index: 1, kind: input, shape index: {}]
  %s2 = inlined_call_operand.hbm [shape: f32[2,1,128], index: 2, kind: output, shape index: {}]
  %s3 = sld [smem:[#allocation0]]
  $region57: #{tpu_custom_call.1} parent=0
    _
  %s5 = ssub.s32 1, %s3
  %s6 = scalar_select 0, %s5, %s3
  $region1: #{tpu_custom_call.1} parent=0
    #allocation3 [shape = 'u8[2048]{0}', space=vmem, size = 0x800, scoped, tag = 'input window, operand 0']
    #allocation4 [shape = 's32[2]{0}', space=sflag, size = 0x8, scoped, tag = 'scoped memory for tpu_custom_call.1']
    #allocation5 [shape = 's32[2]{0}', space=sflag, size = 0x8, scoped, tag = 'scoped memory for tpu_custom_call.1']
    #allocation6 [shape = 'u8[2048]{0}', space=vmem, size = 0x800, scoped, tag = 'input window, operand 1']
    #allocation7 [shape = 's32[2]{0}', space=sflag, size = 0x8, scoped, tag = 'scoped memory for tpu_custom_call.1']
    #allocation8 [shape = 'u8[1024]{0}', space=vmem, size = 0x400, scoped, tag = 'output window, operand 0']
    %7 = vsyncpa [#allocation4], 0
    %s8 = scalar_lea.sflag [#allocation4], 1
    %9 = vsyncpa %s8, 0
    %10 = vsyncpa [#allocation7], 0
    %s11 = scalar_lea.sflag [#allocation7], 1
    %12 = vsyncpa %s11, 0
    %13 = vsyncpa [#allocation5], 0
    %s14 = scalar_lea.sflag [#allocation5], 1
    %15 = vsyncpa %s14, 0
    loop: start=0, step=1, limit=4
    $region2: #{tpu_custom_call.1} parent=1 // loop_pre_header
      _
    $region3: #{tpu_custom_call.1} parent=1 // loop_header
      %s17 = sphi 0, %s21
      %p18 = scmp.ge.s32.totalorder %s17, 4
      %s24 = sphi 0, %s36
      %s25 = sphi 0, %s32
      %s26 = sphi 0, %s24
      %s27 = sphi 0, %s25
      %s28 = sphi 0, %s26
      %s29 = sphi 0, %s27
      %s41 = sphi 0, %s43
      %s44 = sphi 0, %s41
      %s45 = sphi 0, %s44
      %s61 = sphi 0, %s45
      %s69 = sphi 0, %s71
      %s72 = sphi 0, %s69
      %s73 = sphi 0, %s72
      %s89 = sphi 0, %s73
      %s95 = sphi 0, %s97
      %s98 = sphi 0, %s95
      %s99 = sphi 0, %s98
      %s115 = sphi 0, %s99
    $region4: #{tpu_custom_call.1} parent=1 // loop_header_branch
      %20 = sbr.rel (%p18) target = $region8
    $region5: #{tpu_custom_call.1} parent=1 // loop_body
      %s22 = ssub.s32 %s17, 1
      %s23 = ssub.s32 %s17, 2
      %s30 = sadd.s32 1, %s25
      %p31 = scmp.ge.s32.totalorder %s30, 1
      %s32 = scalar_select %p31, 0, %s30
      %s33 = sadd.s32 1, %s24
      %s34 = scalar_select %p31, %s33, %s24
      %p35 = scmp.ge.s32.totalorder %s34, 2
      %s36 = scalar_select %p35, 0, %s34
      %s37 = ssub.s32 %s24, %s36
      %s38 = ssub.s32 %s25, %s32
      %s39 = sor.u32 %s37, %s38
      %p40 = scmp.eq.s32.totalorder %s39, 0
      %s42 = sadd.s32 %s41, 1
      %s43 = scalar_select %p40, %s41, %s42
      %p46 = pneg %p40
      %p47 = scmp.eq.s32.totalorder %s17, 1
      %p48 = por %p46, %p47
      %p49 = scmp.ne.s32.totalorder %s41, %s44
      %p50 = scmp.eq.s32.totalorder %s17, 0
      %p51 = por %p49, %p50
      %p52 = scmp.ne.s32.totalorder %s41, %s44
      %p53 = scmp.eq.s32.totalorder %s22, 1
      %p54 = por %p52, %p53
      %p55 = scmp.ne.s32.totalorder %s44, %s45
      %p56 = scmp.eq.s32.totalorder %s22, 0
      %p57 = por %p55, %p56
      %p58 = scmp.ne.s32.totalorder %s44, %s45
      %p59 = scmp.eq.s32.totalorder %s23, 1
      %p60 = por %p58, %p59
      %p62 = scmp.ne.s32.totalorder %s45, %s61
      %p63 = scmp.eq.s32.totalorder %s23, 0
      %p64 = por %p62, %p63
      %s65 = ssub.s32 %s24, %s36
      %s66 = ssub.s32 %s25, %s32
      %s67 = sor.u32 %s65, %s66
      %p68 = scmp.eq.s32.totalorder %s67, 0
      %s70 = sadd.s32 %s69, 1
      %s71 = scalar_select %p68, %s69, %s70
      %p74 = pneg %p68
      %p75 = scmp.eq.s32.totalorder %s17, 1
      %p76 = por %p74, %p75
      %p77 = scmp.ne.s32.totalorder %s69, %s72
      %p78 = scmp.eq.s32.totalorder %s17, 0
      %p79 = por %p77, %p78
      %p80 = scmp.ne.s32.totalorder %s69, %s72
      %p81 = scmp.eq.s32.totalorder %s22, 1
      %p82 = por %p80, %p81
      %p83 = scmp.ne.s32.totalorder %s72, %s73
      %p84 = scmp.eq.s32.totalorder %s22, 0
      %p85 = por %p83, %p84
      %p86 = scmp.ne.s32.totalorder %s72, %s73
      %p87 = scmp.eq.s32.totalorder %s23, 1
      %p88 = por %p86, %p87
      %p90 = scmp.ne.s32.totalorder %s73, %s89
      %p91 = scmp.eq.s32.totalorder %s23, 0
      %p92 = por %p90, %p91
      %s93 = ssub.s32 %s24, %s36
      %p94 = scmp.eq.s32.totalorder %s93, 0
      %s96 = sadd.s32 %s95, 1
      %s97 = scalar_select %p94, %s95, %s96
      %p100 = pneg %p94
      %p101 = scmp.eq.s32.totalorder %s17, 1
      %p102 = por %p100, %p101
      %p103 = scmp.ne.s32.totalorder %s95, %s98
      %p104 = scmp.eq.s32.totalorder %s17, 0
      %p105 = por %p103, %p104
      %p106 = scmp.ne.s32.totalorder %s95, %s98
      %p107 = scmp.eq.s32.totalorder %s22, 1
      %p108 = por %p106, %p107
      %p109 = scmp.ne.s32.totalorder %s98, %s99
      %p110 = scmp.eq.s32.totalorder %s22, 0
      %p111 = por %p109, %p110
      %p112 = scmp.ne.s32.totalorder %s98, %s99
      %p113 = scmp.eq.s32.totalorder %s23, 1
      %p114 = por %p112, %p113
      %p116 = scmp.ne.s32.totalorder %s99, %s115
      %p117 = scmp.eq.s32.totalorder %s23, 0
      %p118 = por %p116, %p117
      %p119 = scmp.le.s32.totalorder 1, %s17
      %p120 = scmp.lt.s32.totalorder %s17, 3
      %p121 = pnand %p119, %p120
      %p122 = pneg %p121
      // Predicated region
      $region9: #{tpu_custom_call.1} parent=5 // pred_check
        _
      $region10: #{tpu_custom_call.1} parent=5 // pred_check_branch
        %124 = sbr.rel (%p121) target = $region12
      $region11: #{tpu_custom_call.1} parent=5 // pred_region
        %s125 = ssub.s32 %s17, 1
      $region12: #{tpu_custom_call.1} parent=5 // pred_fallthru
        _
      %p126 = scmp.lt.s32.totalorder %s17, 2
      // Predicated region
      $region13: #{tpu_custom_call.1} parent=5 // pred_check
        %p127 = pneg %p126
      $region14: #{tpu_custom_call.1} parent=5 // pred_check_branch
        %129 = sbr.rel (%p127) target = $region16
      $region15: #{tpu_custom_call.1} parent=5 // pred_region
        // Predicated region
        $region17: #{tpu_custom_call.1} parent=15 // pred_check
          %p130 = pneg %p51
        $region18: #{tpu_custom_call.1} parent=15 // pred_check_branch
          %132 = sbr.rel (%p130) target = $region20
        $region19: #{tpu_custom_call.1} parent=15 // pred_region
          %s133 = sand.u32 %s41, 1
          %s134 = scalar_lea.sflag [#allocation4], %s133
          %s135 = sand.u32 %s41, 1
          %s136 = smul.addr %s135, 2
          %s137 = scalar_lea.vmem [#allocation3], %s136
          %139 = vsyncadd %s134, 0
          %s140 = sadd.s32 %s25, %s24
          %s141 = smul.addr %s140, 2
          %s142 = scalar_lea.hbm %s0, %s141
          %s144 = sshll.u32 %s142, 4
          %s145 = int_to_ptr.hbm [resolvable:$true] %s144
          %s146 = sshll.u32 %s137, 4
          %s147 = int_to_ptr.vmem [resolvable:$true] %s146
          %149 = dma.hbm_to_vmem [thread:$0]  %s145, 32, %s147, %s134
        $region20: #{tpu_custom_call.1} parent=15 // pred_fallthru
          _
        // Predicated region
        $region21: #{tpu_custom_call.1} parent=15 // pred_check
          %p150 = pneg %p79
        $region22: #{tpu_custom_call.1} parent=15 // pred_check_branch
          %152 = sbr.rel (%p150) target = $region24
        $region23: #{tpu_custom_call.1} parent=15 // pred_region
          %s153 = sand.u32 %s69, 1
          %s154 = scalar_lea.sflag [#allocation7], %s153
          %s155 = sand.u32 %s69, 1
          %s156 = smul.addr %s155, 2
          %s157 = scalar_lea.vmem [#allocation6], %s156
          %159 = vsyncadd %s154, 0
          %s160 = sadd.s32 %s25, %s24
          %s161 = smul.addr %s160, 2
          %s162 = scalar_lea.hbm %s1, %s161
          %s164 = sshll.u32 %s162, 4
          %s165 = int_to_ptr.hbm [resolvable:$true] %s164
          %s166 = sshll.u32 %s157, 4
          %s167 = int_to_ptr.vmem [resolvable:$true] %s166
          %169 = dma.hbm_to_vmem [thread:$0]  %s165, 32, %s167, %s154
        $region24: #{tpu_custom_call.1} parent=15 // pred_fallthru
          _
      $region16: #{tpu_custom_call.1} parent=5 // pred_fallthru
        _
      %p170 = scmp.le.s32.totalorder 1, %s17
      %p171 = scmp.lt.s32.totalorder %s17, 3
      %p172 = pnand %p170, %p171
      %p173 = pneg %p172
      // Predicated region
      $region25: #{tpu_custom_call.1} parent=5 // pred_check
        _
      $region26: #{tpu_custom_call.1} parent=5 // pred_check_branch
        %175 = sbr.rel (%p172) target = $region28
      $region27: #{tpu_custom_call.1} parent=5 // pred_region
        %s176 = ssub.s32 %s17, 1
        %s177 = sand.u32 %s44, 1
        %s178 = scalar_lea.sflag [#allocation4], %s177
        %s179 = sand.u32 %s44, 1
        %s180 = smul.addr %s179, 2
        %s181 = scalar_lea.vmem [#allocation3], %s180
        // Predicated region
        $region29: #{tpu_custom_call.1} parent=27 // pred_check
          %p182 = pneg %p57
        $region30: #{tpu_custom_call.1} parent=27 // pred_check_branch
          %184 = sbr.rel (%p182) target = $region32
        $region31: #{tpu_custom_call.1} parent=27 // pred_region
          %186 = dma.done %s178, 32
        $region32: #{tpu_custom_call.1} parent=27 // pred_fallthru
          _
        %s187 = sand.u32 %s72, 1
        %s188 = scalar_lea.sflag [#allocation7], %s187
        %s189 = sand.u32 %s72, 1
        %s190 = smul.addr %s189, 2
        %s191 = scalar_lea.vmem [#allocation6], %s190
        // Predicated region
        $region33: #{tpu_custom_call.1} parent=27 // pred_check
          %p192 = pneg %p85
        $region34: #{tpu_custom_call.1} parent=27 // pred_check_branch
          %194 = sbr.rel (%p192) target = $region36
        $region35: #{tpu_custom_call.1} parent=27 // pred_region
          %196 = dma.done %s188, 32
        $region36: #{tpu_custom_call.1} parent=27 // pred_fallthru
          _
        %s197 = sand.u32 %s44, 1
        %s198 = scalar_lea.sflag [#allocation4], %s197
        %s199 = sand.u32 %s44, 1
        %s200 = smul.addr %s199, 2
        %s201 = scalar_lea.vmem [#allocation3], %s200
        %p202 = pneg %p57
        %p203 = pneg %p54
        %s204 = sand.u32 %s72, 1
        %s205 = scalar_lea.sflag [#allocation7], %s204
        %s206 = sand.u32 %s72, 1
        %s207 = smul.addr %s206, 2
        %s208 = scalar_lea.vmem [#allocation6], %s207
        %p209 = pneg %p85
        %p210 = pneg %p82
        %p211 = pneg %p111
        %p212 = pneg %p108
        %s213 = sand.u32 %s98, 1
        %s214 = scalar_lea.sflag [#allocation5], %s213
        %s215 = sand.u32 %s98, 1
        %s216 = scalar_lea.vmem [#allocation8], %s215
        %p217 = scmp.eq.s32.totalorder %s27, 0
        // Predicated region
        $region37: #{tpu_custom_call.1} parent=27 // pred_check
          %p218 = pneg %p217
        $region38: #{tpu_custom_call.1} parent=27 // pred_check_branch
          %220 = sbr.rel (%p218) target = $region40
        $region39: #{tpu_custom_call.1} parent=27 // pred_region
          %s221 = scalar_lea.smem [#allocation2], 0
          %222 = sst [smem:[%s221]] 0.0
          %s223 = scalar_lea.smem [#allocation2], 1
          %224 = sst [smem:[%s223]] 0.0
        $region40: #{tpu_custom_call.1} parent=27 // pred_fallthru
          _
        %v225 = vld [vmem:[%s181] sm:$0x3]
        %v226 = vld [vmem:[%s191] sm:$0x3]
        %v227 = vsub.f32 %v225, %v226
        %v228 = vand.u32 2147483647, %v227
        %vm229 = vcmp.lt.f32.partialorder %v228, 1.0
        %v230 = vmul.f32 %v227, 0.5
        %v231 = vmul.f32 %v230, %v227
        %v232 = vsub.f32 %v228, 0.5
        %v233 = vsel %vm229, %v231, %v232
        %vm234 = vcmp.gt.f32.partialorder %v226, 0.0
        %v235 = vsel %vm234, 1, 0
        %v236 = vcvt.s32.f32 %v235
        %v237 = vmul.f32 %v233, %v236
        %s238 = sld [smem:[#allocation2]]
        %vm239 = vcmask 1041408
        %v240 = vsel %vm239, %v237, 0.0
        %241 = vadd.xlane.f32.xlu0 %v240
        %v242 = vpop.xlane.xlu0 %241
        %v243 = vrot.slane %v242, 4
        %v244 = vadd.f32 %v242, %v243
        %v245 = vrot.slane %v244, 2
        %v246 = vadd.f32 %v244, %v245
        %v247 = vrot.slane %v246, 1
        %v248 = vadd.f32 %v246, %v247
        %s249 = vtos %v248
        %s250 = sadd.f32 %s238, %s249
        %s251 = scalar_lea.smem [#allocation2], 0
        %252 = sst [smem:[%s251]] %s250
        %s253 = sld [smem:[#allocation2 + $0x1]]
        %v254 = vsel %vm239, %v236, 0.0
        %255 = vadd.xlane.f32.xlu0 %v254
        %v256 = vpop.xlane.xlu0 %255
        %v257 = vrot.slane %v256, 4
        %v258 = vadd.f32 %v256, %v257
        %v259 = vrot.slane %v258, 2
        %v260 = vadd.f32 %v258, %v259
        %v261 = vrot.slane %v260, 1
        %v262 = vadd.f32 %v260, %v261
        %s263 = vtos %v262
        %s264 = sadd.f32 %s253, %s263
        %s265 = scalar_lea.smem [#allocation2], 1
        %266 = sst [smem:[%s265]] %s264
        // Predicated region
        $region41: #{tpu_custom_call.1} parent=27 // pred_check
          %p267 = pneg %p217
        $region42: #{tpu_custom_call.1} parent=27 // pred_check_branch
          %269 = sbr.rel (%p267) target = $region44
        $region43: #{tpu_custom_call.1} parent=27 // pred_region
          %s270 = sld [smem:[#allocation2]]
          %s271 = sld [smem:[#allocation2 + $0x1]]
          %s272 = sadd.f32 %s271, 1.0
          %v273 = vstv %s272
          %v274 = vrcp.pop %v273
          %v275 = vmul.f32 %v273, %v274
          %v276 = vsub.f32 1.0, %v275
          %v277 = vmul.f32 %v274, %v276
          %v278 = vadd.f32 %v274, %v277
          %vm279 = vweird.f32 %v273
          %vm280 = vweird.f32 %v274
          %vm281 = vmor %vm279, %vm280
          %v282 = vsel %vm281, %v274, %v278
          %v283 = vand.u32 2147483647, %v273
          %vm284 = vcmp.eq.f32.partialorder %v283, 8.507059e+37
          %v285 = vand.u32 %v273, 2147483648
          %v286 = vor.u32 1.1754944e-38, %v285
          %v287 = vsel %vm284, %v286, %v282
          %s288 = vtos %v287
          %s289 = smul.f32 %s270, %s288
          %v290 = vstv %s289
          %291 = vst [vmem:[%s216] sm:$0x1] %v290
        $region44: #{tpu_custom_call.1} parent=27 // pred_fallthru
          _
        %s292 = sand.u32 %s98, 1
        %s293 = scalar_lea.sflag [#allocation5], %s292
        %s294 = sand.u32 %s98, 1
        %s295 = scalar_lea.vmem [#allocation8], %s294
        // Predicated region
        $region45: #{tpu_custom_call.1} parent=27 // pred_check
          %p296 = pneg %p108
        $region46: #{tpu_custom_call.1} parent=27 // pred_check_branch
          %298 = sbr.rel (%p296) target = $region48
        $region47: #{tpu_custom_call.1} parent=27 // pred_region
          %300 = vsyncadd %s293, 0
          %s301 = scalar_lea.hbm %s2, %s26
          %s303 = sshll.u32 %s295, 4
          %s304 = int_to_ptr.vmem [resolvable:$true] %s303
          %s305 = sshll.u32 %s301, 4
          %s306 = int_to_ptr.hbm [resolvable:$true] %s305
          %308 = dma.vmem_to_hbm [thread:$0]  %s304, 16, %s306, %s293
        $region48: #{tpu_custom_call.1} parent=27 // pred_fallthru
          _
      $region28: #{tpu_custom_call.1} parent=5 // pred_fallthru
        _
      %p309 = scmp.le.s32.totalorder 2, %s17
      // Predicated region
      $region49: #{tpu_custom_call.1} parent=5 // pred_check
        %p310 = pneg %p309
      $region50: #{tpu_custom_call.1} parent=5 // pred_check_branch
        %312 = sbr.rel (%p310) target = $region52
      $region51: #{tpu_custom_call.1} parent=5 // pred_region
        %s313 = ssub.s32 %s17, 2
        // Predicated region
        $region53: #{tpu_custom_call.1} parent=51 // pred_check
          %p314 = pneg %p114
        $region54: #{tpu_custom_call.1} parent=51 // pred_check_branch
          %316 = sbr.rel (%p314) target = $region56
        $region55: #{tpu_custom_call.1} parent=51 // pred_region
          %s317 = sand.u32 %s99, 1
          %s318 = scalar_lea.sflag [#allocation5], %s317
          %s319 = sand.u32 %s99, 1
          %s320 = scalar_lea.vmem [#allocation8], %s319
          %322 = dma.done %s318, 16
        $region56: #{tpu_custom_call.1} parent=51 // pred_fallthru
          _
      $region52: #{tpu_custom_call.1} parent=5 // pred_fallthru
        _
    $region6: #{tpu_custom_call.1} parent=1 // loop_footer
      %s21 = sadd.s32 1, %s17
    $region7: #{tpu_custom_call.1} parent=1 // loop_footer_branch
      %16 = sbr.rel target = $region3
    $region8: #{tpu_custom_call.1} parent=1 // loop_exit
      _
    %323 = vsyncpa [#allocation4], 1
    %s324 = scalar_lea.sflag [#allocation4], 1
    %325 = vsyncpa %s324, 1
    %326 = vsyncpa [#allocation7], 1
    %s327 = scalar_lea.sflag [#allocation7], 1
    %328 = vsyncpa %s327, 1
    %329 = vsyncpa [#allocation5], 1
    %s330 = scalar_lea.sflag [#allocation5], 1
    %331 = vsyncpa %s330, 1

</llo_original>
